<compile_context>
chip_gen: v7x
topology: tpu7x:2x2x1
jax: 0.10.0
libtpu: 0.0.40
codegen_flags: <defaults>
</compile_context>

<pallas_src>
import functools

import jax
import jax.numpy as jnp
from jax.experimental import pallas as pl
from jax.experimental.pallas import tpu as pltpu

CAT_LEN = 12            # len(cat_cardinalities)
NUM_CLASSES = 20        # each cardinality
EMB_DIM = 4             # embedding_dim
NUM_CONTINUOUS = 4      # -> input channels C = 16
IN_CHANNELS = CAT_LEN + NUM_CONTINUOUS
HIDDEN = (256, 128, 32, 8, 2)
K_FRONT = 256           # 12*20 = 240 one-hot lanes, zero-padded to one MXU tile
MAX_TB = 1024           # batch tile: few-MB VMEM footprint on v5e/v6e/v7x


def _round_up(x, m):
    return (x + m - 1) // m * m


# ----------------------------------------------------------------------------
# Fused kernel: one-hot front end + fc1..fc5 (+ ReLUs), weights VMEM-resident.
# ----------------------------------------------------------------------------
def _fused_kernel(pv_ref,
                  w1e_ref, w1c_ref, b1_ref,
                  w2_ref, b2_ref, w3_ref, b3_ref,
                  w4_ref, b4_ref, w5_ref, b5_ref,
                  out_ref, *, cat_len, num_classes, k_front):
    f32 = jnp.float32
    bf16 = jnp.bfloat16

    pv = pv_ref[...]                                     # (TB, 16) f32
    tb = pv.shape[0]
    idx = pv[:, :cat_len].astype(jnp.int32)              # .long() (non-negative ids)
    cont = pv[:, cat_len:].astype(bf16)                  # (TB, 4)

    # One-hot over a 256-lane front; lanes 240..255 hit zero rows of the fused weight.
    offs = jax.lax.broadcasted_iota(jnp.int32, (1, cat_len), 1) * num_classes
    tgt = idx + offs                                      # (TB, 12) hot-lane per feature
    lane = jax.lax.broadcasted_iota(jnp.int32, (tb, k_front), 1)
    hit = lane == tgt[:, 0:1]
    for i in range(1, cat_len):                           # bool OR, single convert below
        hit = jnp.logical_or(hit, lane == tgt[:, i:i + 1])
    oh = jnp.where(hit, 1.0, 0.0).astype(bf16)            # exact 0/1 in bf16

    # fc1: fused (one-hot @ (emb_tables @ W1_emb)) + cont @ W1_cont, bias, ReLU
    h = jnp.dot(oh, w1e_ref[...], preferred_element_type=f32)
    h = h + jnp.dot(cont, w1c_ref[...], preferred_element_type=f32)
    h = jnp.maximum(h + b1_ref[...], 0.0)                                   # (TB, 256)

    h = jnp.maximum(jnp.dot(h.astype(bf16), w2_ref[...],
                            preferred_element_type=f32) + b2_ref[...], 0.0)  # (TB, 128)
    h = jnp.maximum(jnp.dot(h.astype(bf16), w3_ref[...],
                            preferred_element_type=f32) + b3_ref[...], 0.0)  # (TB, 32)
    h = jnp.maximum(jnp.dot(h.astype(bf16), w4_ref[...],
                            preferred_element_type=f32) + b4_ref[...], 0.0)  # (TB, 8)
    # fc5: no activation, no softmax in forward()
    out_ref[...] = jnp.dot(h.astype(bf16), w5_ref[...],
                           preferred_element_type=f32) + b5_ref[...]         # (TB, 2)


# ----------------------------------------------------------------------------
# Wrapper
# ----------------------------------------------------------------------------
@jax.jit
def mlp_classifier_forward(img_data, params):
    # Pixel-vector extraction: only (B, 16) floats enter the kernel.
    pv = img_data[:, :, 3, 3].astype(jnp.float32)        # (B, C)
    B = pv.shape[0]

    TB = min(MAX_TB, _round_up(B, 8))                    # (8,128)-legal batch tile
    B_pad = _round_up(B, TB)
    if B_pad != B:
        pv = jnp.pad(pv, ((0, B_pad - B), (0, 0)))       # id 0 is valid -> harmless rows

    weights = (params["w1e_fused"], params["w1c"], params["b1"],
               params["w2"], params["b2"], params["w3"], params["b3"],
               params["w4"], params["b4"], params["w5"], params["b5"])

    kern = functools.partial(_fused_kernel, cat_len=CAT_LEN,
                             num_classes=NUM_CLASSES, k_front=K_FRONT)

    in_specs = [pl.BlockSpec((TB, IN_CHANNELS), lambda i: (i, 0))]           # pv: tiled
    in_specs += [pl.BlockSpec(w.shape, lambda i: (0, 0)) for w in weights]   # weights: resident

    out = pl.pallas_call(
        kern,
        grid=(pl.cdiv(B_pad, TB),),
        out_shape=jax.ShapeDtypeStruct((B_pad, HIDDEN[-1]), jnp.float32),
        in_specs=in_specs,
        out_specs=pl.BlockSpec((TB, HIDDEN[-1]), lambda i: (i, 0)),
        compiler_params=pltpu.CompilerParams(dimension_semantics=("parallel",)),
    )(pv, *weights)
    return out[:B]


# ----------------------------------------------------------------------------
# Parameters (deterministic synthetic init) + f32 reference copies
# ----------------------------------------------------------------------------
def make_params(key):
    def nrm(k, shape, s=0.05):
        return (s * jax.random.normal(k, shape)).astype(jnp.float32)

    ks = jax.random.split(key, 24)
    tables = [nrm(ks[i], (NUM_CLASSES, EMB_DIM), 1.0) for i in range(CAT_LEN)]  # nn.Embedding ~N(0,1)

    in_dim = NUM_CONTINUOUS + CAT_LEN * EMB_DIM          # 52
    dims = (in_dim,) + HIDDEN                            # (52, 256, 128, 32, 8, 2)

    w1 = nrm(ks[12], (dims[0], dims[1])); b1 = nrm(ks[13], (1, dims[1]))
    w2 = nrm(ks[14], (dims[1], dims[2])); b2 = nrm(ks[15], (1, dims[2]))
    w3 = nrm(ks[16], (dims[2], dims[3])); b3 = nrm(ks[17], (1, dims[3]))
    w4 = nrm(ks[18], (dims[3], dims[4])); b4 = nrm(ks[19], (1, dims[4]))
    w5 = nrm(ks[20], (dims[4], dims[5])); b5 = nrm(ks[21], (1, dims[5]))

    w1c = w1[:NUM_CONTINUOUS, :]                         # (4, 256)  continuous rows of fc1
    w1e = w1[NUM_CONTINUOUS:, :]                         # (48, 256) embedding rows of fc1

    # Block-diagonal embedding matrix (240, 48), pre-fused with fc1's embedding rows and
    # zero-padded to 256 rows -> one clean 256-wide MXU contraction in the kernel.
    etab = jnp.zeros((CAT_LEN * NUM_CLASSES, CAT_LEN * EMB_DIM), jnp.float32)
    for i in range(CAT_LEN):
        etab = etab.at[i * NUM_CLASSES:(i + 1) * NUM_CLASSES,
                       i * EMB_DIM:(i + 1) * EMB_DIM].set(tables[i])
    w1e_fused = etab @ w1e                               # (240, 256) f32
    w1e_fused = jnp.pad(w1e_fused, ((0, K_FRONT - w1e_fused.shape[0]), (0, 0)))

    bf16 = jnp.bfloat16
    params = {
        "w1e_fused": w1e_fused.astype(bf16),
        "w1c": w1c.astype(bf16), "b1": b1,
        "w2": w2.astype(bf16), "b2": b2,
        "w3": w3.astype(bf16), "b3": b3,
        "w4": w4.astype(bf16), "b4": b4,
        "w5": w5.astype(bf16), "b5": b5,
    }
    ref = {"tables": tables, "w1": w1, "b1": b1, "w2": w2, "b2": b2,
           "w3": w3, "b3": b3, "w4": w4, "b4": b4, "w5": w5, "b5": b5}
    return params, ref


def reference_forward(img_data, ref):
    """Pure-JAX f32 reference with the original (unfused) structure."""
    pv = img_data[:, :, 3, 3].astype(jnp.float32)
    idx = pv[:, :CAT_LEN].astype(jnp.int32)
    cont = pv[:, CAT_LEN:]
    emb = jnp.concatenate([ref["tables"][i][idx[:, i]] for i in range(CAT_LEN)], axis=1)
    x = jnp.concatenate([cont, emb], axis=1)
    h = jax.nn.relu(x @ ref["w1"] + ref["b1"])
    h = jax.nn.relu(h @ ref["w2"] + ref["b2"])
    h = jax.nn.relu(h @ ref["w3"] + ref["b3"])
    h = jax.nn.relu(h @ ref["w4"] + ref["b4"])
    return h @ ref["w5"] + ref["b5"]


if __name__ == "__main__":
    key = jax.random.PRNGKey(0)
    k_img, k_cat, k_p = jax.random.split(key, 3)

    B, H, W = 2, 8, 8
    img = jax.random.normal(k_img, (B, IN_CHANNELS, H, W), dtype=jnp.float32)
    # first 12 channels carry categorical class ids (stored as floats)
    cat_vals = jax.random.randint(k_cat, (B, CAT_LEN, H, W), 0, NUM_CLASSES)
    img = img.at[:, :CAT_LEN].set(cat_vals.astype(jnp.float32))

    params, ref = make_params(k_p)
    out = jax.block_until_ready(mlp_classifier_forward(img, params))
    assert out.shape == (B, HIDDEN[-1]), out.shape

    expected = reference_forward(img, ref)
    assert jnp.allclose(out, expected, atol=5e-2, rtol=5e-2), (
        "kernel output diverges from f32 reference")
    print("KERNEL_OK")
</pallas_src>

<mosaic_0001>
module attributes {stable_mosaic.version = 11 : i64} {
  func.func @_fused_kernel(%arg0: i32, %arg1: memref<8x16xf32, #tpu.memory_space<vmem>>, %arg2: memref<256x256xbf16, #tpu.memory_space<vmem>>, %arg3: memref<4x256xbf16, #tpu.memory_space<vmem>>, %arg4: memref<1x256xf32, #tpu.memory_space<vmem>>, %arg5: memref<256x128xbf16, #tpu.memory_space<vmem>>, %arg6: memref<1x128xf32, #tpu.memory_space<vmem>>, %arg7: memref<128x32xbf16, #tpu.memory_space<vmem>>, %arg8: memref<1x32xf32, #tpu.memory_space<vmem>>, %arg9: memref<32x8xbf16, #tpu.memory_space<vmem>>, %arg10: memref<1x8xf32, #tpu.memory_space<vmem>>, %arg11: memref<8x2xbf16, #tpu.memory_space<vmem>>, %arg12: memref<1x2xf32, #tpu.memory_space<vmem>>, %arg13: memref<8x2xf32, #tpu.memory_space<vmem>>) attributes {dimension_semantics = [#tpu.dimension_semantics<parallel>], iteration_bounds = array<i64: 1>, scalar_prefetch = 0 : i64, scratch_operands = 0 : i64, tpu.core_type = #tpu.core_type<tc>, window_params = [{transform_indices = @transform_0, window_bounds = array<i64: 8, 16>}, {pipeline_mode = #tpu.pipeline_mode<synchronous>, transform_indices = @transform_1, window_bounds = array<i64: 256, 256>}, {pipeline_mode = #tpu.pipeline_mode<synchronous>, transform_indices = @transform_2, window_bounds = array<i64: 4, 256>}, {pipeline_mode = #tpu.pipeline_mode<synchronous>, transform_indices = @transform_3, window_bounds = array<i64: 1, 256>}, {pipeline_mode = #tpu.pipeline_mode<synchronous>, transform_indices = @transform_4, window_bounds = array<i64: 256, 128>}, {pipeline_mode = #tpu.pipeline_mode<synchronous>, transform_indices = @transform_5, window_bounds = array<i64: 1, 128>}, {pipeline_mode = #tpu.pipeline_mode<synchronous>, transform_indices = @transform_6, window_bounds = array<i64: 128, 32>}, {pipeline_mode = #tpu.pipeline_mode<synchronous>, transform_indices = @transform_7, window_bounds = array<i64: 1, 32>}, {pipeline_mode = #tpu.pipeline_mode<synchronous>, transform_indices = @transform_8, window_bounds = array<i64: 32, 8>}, {pipeline_mode = #tpu.pipeline_mode<synchronous>, transform_indices = @transform_9, window_bounds = array<i64: 1, 8>}, {pipeline_mode = #tpu.pipeline_mode<synchronous>, transform_indices = @transform_10, window_bounds = array<i64: 8, 2>}, {pipeline_mode = #tpu.pipeline_mode<synchronous>, transform_indices = @transform_11, window_bounds = array<i64: 1, 2>}, {transform_indices = @transform_12, window_bounds = array<i64: 8, 2>}]} {
    %c0 = arith.constant 0 : index
    %c0_0 = arith.constant 0 : index
    %0 = vector.load %arg1[%c0, %c0_0] : memref<8x16xf32, #tpu.memory_space<vmem>>, vector<8x16xf32>
    %1 = vector.extract_strided_slice %0 {offsets = [0, 0], sizes = [8, 12], strides = [1, 1]} : vector<8x16xf32> to vector<8x12xf32>
    %2 = arith.fptosi %1 : vector<8x12xf32> to vector<8x12xi32>
    %3 = vector.extract_strided_slice %0 {offsets = [0, 12], sizes = [8, 4], strides = [1, 1]} : vector<8x16xf32> to vector<8x4xf32>
    %4 = arith.truncf %3 : vector<8x4xf32> to vector<8x4xbf16>
    %5 = tpu.iota {dimensions = array<i32: 1>} : vector<1x12xi32>
    %c20_i32 = arith.constant 20 : i32
    %6 = vector.broadcast %c20_i32 : i32 to vector<1x12xi32>
    %7 = arith.muli %5, %6 : vector<1x12xi32>
    %8 = vector.broadcast %7 : vector<1x12xi32> to vector<8x12xi32>
    %9 = arith.addi %2, %8 : vector<8x12xi32>
    %10 = tpu.iota {dimensions = array<i32: 1>} : vector<8x256xi32>
    %11 = vector.extract_strided_slice %9 {offsets = [0, 0], sizes = [8, 1], strides = [1, 1]} : vector<8x12xi32> to vector<8x1xi32>
    %12 = vector.broadcast %11 : vector<8x1xi32> to vector<8x256xi32>
    %13 = arith.cmpi eq, %10, %12 : vector<8x256xi32>
    %14 = vector.extract_strided_slice %9 {offsets = [0, 1], sizes = [8, 1], strides = [1, 1]} : vector<8x12xi32> to vector<8x1xi32>
    %15 = vector.broadcast %14 : vector<8x1xi32> to vector<8x256xi32>
    %16 = arith.cmpi eq, %10, %15 : vector<8x256xi32>
    %17 = arith.ori %13, %16 : vector<8x256xi1>
    %18 = vector.extract_strided_slice %9 {offsets = [0, 2], sizes = [8, 1], strides = [1, 1]} : vector<8x12xi32> to vector<8x1xi32>
    %19 = vector.broadcast %18 : vector<8x1xi32> to vector<8x256xi32>
    %20 = arith.cmpi eq, %10, %19 : vector<8x256xi32>
    %21 = arith.ori %17, %20 : vector<8x256xi1>
    %22 = vector.extract_strided_slice %9 {offsets = [0, 3], sizes = [8, 1], strides = [1, 1]} : vector<8x12xi32> to vector<8x1xi32>
    %23 = vector.broadcast %22 : vector<8x1xi32> to vector<8x256xi32>
    %24 = arith.cmpi eq, %10, %23 : vector<8x256xi32>
    %25 = arith.ori %21, %24 : vector<8x256xi1>
    %26 = vector.extract_strided_slice %9 {offsets = [0, 4], sizes = [8, 1], strides = [1, 1]} : vector<8x12xi32> to vector<8x1xi32>
    %27 = vector.broadcast %26 : vector<8x1xi32> to vector<8x256xi32>
    %28 = arith.cmpi eq, %10, %27 : vector<8x256xi32>
    %29 = arith.ori %25, %28 : vector<8x256xi1>
    %30 = vector.extract_strided_slice %9 {offsets = [0, 5], sizes = [8, 1], strides = [1, 1]} : vector<8x12xi32> to vector<8x1xi32>
    %31 = vector.broadcast %30 : vector<8x1xi32> to vector<8x256xi32>
    %32 = arith.cmpi eq, %10, %31 : vector<8x256xi32>
    %33 = arith.ori %29, %32 : vector<8x256xi1>
    %34 = vector.extract_strided_slice %9 {offsets = [0, 6], sizes = [8, 1], strides = [1, 1]} : vector<8x12xi32> to vector<8x1xi32>
    %35 = vector.broadcast %34 : vector<8x1xi32> to vector<8x256xi32>
    %36 = arith.cmpi eq, %10, %35 : vector<8x256xi32>
    %37 = arith.ori %33, %36 : vector<8x256xi1>
    %38 = vector.extract_strided_slice %9 {offsets = [0, 7], sizes = [8, 1], strides = [1, 1]} : vector<8x12xi32> to vector<8x1xi32>
    %39 = vector.broadcast %38 : vector<8x1xi32> to vector<8x256xi32>
    %40 = arith.cmpi eq, %10, %39 : vector<8x256xi32>
    %41 = arith.ori %37, %40 : vector<8x256xi1>
    %42 = vector.extract_strided_slice %9 {offsets = [0, 8], sizes = [8, 1], strides = [1, 1]} : vector<8x12xi32> to vector<8x1xi32>
    %43 = vector.broadcast %42 : vector<8x1xi32> to vector<8x256xi32>
    %44 = arith.cmpi eq, %10, %43 : vector<8x256xi32>
    %45 = arith.ori %41, %44 : vector<8x256xi1>
    %46 = vector.extract_strided_slice %9 {offsets = [0, 9], sizes = [8, 1], strides = [1, 1]} : vector<8x12xi32> to vector<8x1xi32>
    %47 = vector.broadcast %46 : vector<8x1xi32> to vector<8x256xi32>
    %48 = arith.cmpi eq, %10, %47 : vector<8x256xi32>
    %49 = arith.ori %45, %48 : vector<8x256xi1>
    %50 = vector.extract_strided_slice %9 {offsets = [0, 10], sizes = [8, 1], strides = [1, 1]} : vector<8x12xi32> to vector<8x1xi32>
    %51 = vector.broadcast %50 : vector<8x1xi32> to vector<8x256xi32>
    %52 = arith.cmpi eq, %10, %51 : vector<8x256xi32>
    %53 = arith.ori %49, %52 : vector<8x256xi1>
    %54 = vector.extract_strided_slice %9 {offsets = [0, 11], sizes = [8, 1], strides = [1, 1]} : vector<8x12xi32> to vector<8x1xi32>
    %55 = vector.broadcast %54 : vector<8x1xi32> to vector<8x256xi32>
    %56 = arith.cmpi eq, %10, %55 : vector<8x256xi32>
    %57 = arith.ori %53, %56 : vector<8x256xi1>
    %cst = arith.constant 1.000000e+00 : f32
    %cst_1 = arith.constant 0.000000e+00 : f32
    %58 = vector.broadcast %cst : f32 to vector<8x256xf32>
    %59 = vector.broadcast %cst_1 : f32 to vector<8x256xf32>
    %60 = arith.select %57, %58, %59 : vector<8x256xi1>, vector<8x256xf32>
    %61 = arith.truncf %60 : vector<8x256xf32> to vector<8x256xbf16>
    %c0_2 = arith.constant 0 : index
    %c0_3 = arith.constant 0 : index
    %62 = vector.load %arg2[%c0_2, %c0_3] : memref<256x256xbf16, #tpu.memory_space<vmem>>, vector<256x256xbf16>
    %cst_4 = arith.constant dense<0.000000e+00> : vector<8x256xf32>
    %63 = tpu.matmul %61, %62, %cst_4 {dimension_numbers = #tpu.dot_dimension_numbers<[1], [0], [0], [1], [0, 0, 1, 1], [], []>} : vector<8x256xbf16>, vector<256x256xbf16>, vector<8x256xf32> -> vector<8x256xf32>
    %c0_5 = arith.constant 0 : index
    %c0_6 = arith.constant 0 : index
    %64 = vector.load %arg3[%c0_5, %c0_6] : memref<4x256xbf16, #tpu.memory_space<vmem>>, vector<4x256xbf16>
    %cst_7 = arith.constant dense<0.000000e+00> : vector<8x256xf32>
    %65 = tpu.matmul %4, %64, %cst_7 {dimension_numbers = #tpu.dot_dimension_numbers<[1], [0], [0], [1], [0, 0, 1, 1], [], []>} : vector<8x4xbf16>, vector<4x256xbf16>, vector<8x256xf32> -> vector<8x256xf32>
    %66 = arith.addf %63, %65 : vector<8x256xf32>
    %c0_8 = arith.constant 0 : index
    %c0_9 = arith.constant 0 : index
    %67 = vector.load %arg4[%c0_8, %c0_9] : memref<1x256xf32, #tpu.memory_space<vmem>>, vector<1x256xf32>
    %68 = vector.broadcast %67 : vector<1x256xf32> to vector<8x256xf32>
    %69 = arith.addf %66, %68 : vector<8x256xf32>
    %cst_10 = arith.constant 0.000000e+00 : f32
    %70 = vector.broadcast %cst_10 : f32 to vector<8x256xf32>
    %71 = arith.maximumf %69, %70 : vector<8x256xf32>
    %72 = arith.truncf %71 : vector<8x256xf32> to vector<8x256xbf16>
    %c0_11 = arith.constant 0 : index
    %c0_12 = arith.constant 0 : index
    %73 = vector.load %arg5[%c0_11, %c0_12] : memref<256x128xbf16, #tpu.memory_space<vmem>>, vector<256x128xbf16>
    %cst_13 = arith.constant dense<0.000000e+00> : vector<8x128xf32>
    %74 = tpu.matmul %72, %73, %cst_13 {dimension_numbers = #tpu.dot_dimension_numbers<[1], [0], [0], [1], [0, 0, 1, 1], [], []>} : vector<8x256xbf16>, vector<256x128xbf16>, vector<8x128xf32> -> vector<8x128xf32>
    %c0_14 = arith.constant 0 : index
    %c0_15 = arith.constant 0 : index
    %75 = vector.load %arg6[%c0_14, %c0_15] : memref<1x128xf32, #tpu.memory_space<vmem>>, vector<1x128xf32>
    %76 = vector.broadcast %75 : vector<1x128xf32> to vector<8x128xf32>
    %77 = arith.addf %74, %76 : vector<8x128xf32>
    %cst_16 = arith.constant 0.000000e+00 : f32
    %78 = vector.broadcast %cst_16 : f32 to vector<8x128xf32>
    %79 = arith.maximumf %77, %78 : vector<8x128xf32>
    %80 = arith.truncf %79 : vector<8x128xf32> to vector<8x128xbf16>
    %c0_17 = arith.constant 0 : index
    %c0_18 = arith.constant 0 : index
    %81 = vector.load %arg7[%c0_17, %c0_18] : memref<128x32xbf16, #tpu.memory_space<vmem>>, vector<128x32xbf16>
    %cst_19 = arith.constant dense<0.000000e+00> : vector<8x32xf32>
    %82 = tpu.matmul %80, %81, %cst_19 {dimension_numbers = #tpu.dot_dimension_numbers<[1], [0], [0], [1], [0, 0, 1, 1], [], []>} : vector<8x128xbf16>, vector<128x32xbf16>, vector<8x32xf32> -> vector<8x32xf32>
    %c0_20 = arith.constant 0 : index
    %c0_21 = arith.constant 0 : index
    %83 = vector.load %arg8[%c0_20, %c0_21] : memref<1x32xf32, #tpu.memory_space<vmem>>, vector<1x32xf32>
    %84 = vector.broadcast %83 : vector<1x32xf32> to vector<8x32xf32>
    %85 = arith.addf %82, %84 : vector<8x32xf32>
    %cst_22 = arith.constant 0.000000e+00 : f32
    %86 = vector.broadcast %cst_22 : f32 to vector<8x32xf32>
    %87 = arith.maximumf %85, %86 : vector<8x32xf32>
    %88 = arith.truncf %87 : vector<8x32xf32> to vector<8x32xbf16>
    %c0_23 = arith.constant 0 : index
    %c0_24 = arith.constant 0 : index
    %89 = vector.load %arg9[%c0_23, %c0_24] : memref<32x8xbf16, #tpu.memory_space<vmem>>, vector<32x8xbf16>
    %cst_25 = arith.constant dense<0.000000e+00> : vector<8x8xf32>
    %90 = tpu.matmul %88, %89, %cst_25 {dimension_numbers = #tpu.dot_dimension_numbers<[1], [0], [0], [1], [0, 0, 1, 1], [], []>} : vector<8x32xbf16>, vector<32x8xbf16>, vector<8x8xf32> -> vector<8x8xf32>
    %c0_26 = arith.constant 0 : index
    %c0_27 = arith.constant 0 : index
    %91 = vector.load %arg10[%c0_26, %c0_27] : memref<1x8xf32, #tpu.memory_space<vmem>>, vector<1x8xf32>
    %92 = vector.broadcast %91 : vector<1x8xf32> to vector<8x8xf32>
    %93 = arith.addf %90, %92 : vector<8x8xf32>
    %cst_28 = arith.constant 0.000000e+00 : f32
    %94 = vector.broadcast %cst_28 : f32 to vector<8x8xf32>
    %95 = arith.maximumf %93, %94 : vector<8x8xf32>
    %96 = arith.truncf %95 : vector<8x8xf32> to vector<8x8xbf16>
    %c0_29 = arith.constant 0 : index
    %c0_30 = arith.constant 0 : index
    %97 = vector.load %arg11[%c0_29, %c0_30] : memref<8x2xbf16, #tpu.memory_space<vmem>>, vector<8x2xbf16>
    %cst_31 = arith.constant dense<0.000000e+00> : vector<8x2xf32>
    %98 = tpu.matmul %96, %97, %cst_31 {dimension_numbers = #tpu.dot_dimension_numbers<[1], [0], [0], [1], [0, 0, 1, 1], [], []>} : vector<8x8xbf16>, vector<8x2xbf16>, vector<8x2xf32> -> vector<8x2xf32>
    %c0_32 = arith.constant 0 : index
    %c0_33 = arith.constant 0 : index
    %99 = vector.load %arg12[%c0_32, %c0_33] : memref<1x2xf32, #tpu.memory_space<vmem>>, vector<1x2xf32>
    %100 = vector.broadcast %99 : vector<1x2xf32> to vector<8x2xf32>
    %101 = arith.addf %98, %100 : vector<8x2xf32>
    %c0_34 = arith.constant 0 : index
    %c0_35 = arith.constant 0 : index
    %102 = vector.load %arg13[%c0_34, %c0_35] : memref<8x2xf32, #tpu.memory_space<vmem>>, vector<8x2xf32>
    tpu.vector_store %arg13[%c0_34, %c0_35], %101 {strides = array<i32>} : memref<8x2xf32, #tpu.memory_space<vmem>>, vector<8x2xf32>,
    return
  }
  func.func @transform_0(%arg0: i32) -> (i32, i32) {
    %c0_i32 = arith.constant 0 : i32
    %c0_i32_0 = arith.constant 0 : i32
    return %arg0, %c0_i32 : i32, i32
  }
  func.func @transform_1(%arg0: i32) -> (i32, i32) {
    %c0_i32 = arith.constant 0 : i32
    %c0_i32_0 = arith.constant 0 : i32
    %c0_i32_1 = arith.constant 0 : i32
    return %c0_i32, %c0_i32_0 : i32, i32
  }
  func.func @transform_2(%arg0: i32) -> (i32, i32) {
    %c0_i32 = arith.constant 0 : i32
    %c0_i32_0 = arith.constant 0 : i32
    %c0_i32_1 = arith.constant 0 : i32
    return %c0_i32, %c0_i32_0 : i32, i32
  }
  func.func @transform_3(%arg0: i32) -> (i32, i32) {
    %c0_i32 = arith.constant 0 : i32
    %c0_i32_0 = arith.constant 0 : i32
    %c0_i32_1 = arith.constant 0 : i32
    return %c0_i32, %c0_i32_0 : i32, i32
  }
  func.func @transform_4(%arg0: i32) -> (i32, i32) {
    %c0_i32 = arith.constant 0 : i32
    %c0_i32_0 = arith.constant 0 : i32
    %c0_i32_1 = arith.constant 0 : i32
    return %c0_i32, %c0_i32_0 : i32, i32
  }
  func.func @transform_5(%arg0: i32) -> (i32, i32) {
    %c0_i32 = arith.constant 0 : i32
    %c0_i32_0 = arith.constant 0 : i32
    %c0_i32_1 = arith.constant 0 : i32
    return %c0_i32, %c0_i32_0 : i32, i32
  }
  func.func @transform_6(%arg0: i32) -> (i32, i32) {
    %c0_i32 = arith.constant 0 : i32
    %c0_i32_0 = arith.constant 0 : i32
    %c0_i32_1 = arith.constant 0 : i32
    return %c0_i32, %c0_i32_0 : i32, i32
  }
  func.func @transform_7(%arg0: i32) -> (i32, i32) {
    %c0_i32 = arith.constant 0 : i32
    %c0_i32_0 = arith.constant 0 : i32
    %c0_i32_1 = arith.constant 0 : i32
    return %c0_i32, %c0_i32_0 : i32, i32
  }
  func.func @transform_8(%arg0: i32) -> (i32, i32) {
    %c0_i32 = arith.constant 0 : i32
    %c0_i32_0 = arith.constant 0 : i32
    %c0_i32_1 = arith.constant 0 : i32
    return %c0_i32, %c0_i32_0 : i32, i32
  }
  func.func @transform_9(%arg0: i32) -> (i32, i32) {
    %c0_i32 = arith.constant 0 : i32
    %c0_i32_0 = arith.constant 0 : i32
    %c0_i32_1 = arith.constant 0 : i32
    return %c0_i32, %c0_i32_0 : i32, i32
  }
  func.func @transform_10(%arg0: i32) -> (i32, i32) {
    %c0_i32 = arith.constant 0 : i32
    %c0_i32_0 = arith.constant 0 : i32
    %c0_i32_1 = arith.constant 0 : i32
    return %c0_i32, %c0_i32_0 : i32, i32
  }
  func.func @transform_11(%arg0: i32) -> (i32, i32) {
    %c0_i32 = arith.constant 0 : i32
    %c0_i32_0 = arith.constant 0 : i32
    %c0_i32_1 = arith.constant 0 : i32
    return %c0_i32, %c0_i32_0 : i32, i32
  }
  func.func @transform_12(%arg0: i32) -> (i32, i32) {
    %c0_i32 = arith.constant 0 : i32
    %c0_i32_0 = arith.constant 0 : i32
    return %arg0, %c0_i32 : i32, i32
  }
}

</mosaic_0001>

<llo_original>
// kernel: mlp_classifier_forward.1
$region0: #{mlp_classifier_forward.1}
  #allocation0 [shape = 'u32[]', space=smem, size = 0x4, offset = 0x4, fixed_abs, tag = 'smem constant byte address 0x4 - core index']
  #allocation1 [shape = 'u32[144,128]{1,0:T(1,128)}', space=vmem, size = 0x12000, scoped, tag = 'internal scratch']
  %s0 = inlined_call_operand.vmem [shape: f32[8,16], index: 0, kind: input, shape index: {}]
  %s1 = inlined_call_operand.hbm [shape: bf16[256,256], index: 1, kind: input, shape index: {}]
  %s2 = inlined_call_operand.vmem [shape: bf16[4,256], index: 2, kind: input, shape index: {}]
  %s3 = inlined_call_operand.vmem [shape: f32[1,256], index: 3, kind: input, shape index: {}]
  %s4 = inlined_call_operand.vmem [shape: bf16[256,128], index: 4, kind: input, shape index: {}]
  %s5 = inlined_call_operand.vmem [shape: f32[1,128], index: 5, kind: input, shape index: {}]
  %s6 = inlined_call_operand.vmem [shape: bf16[128,32], index: 6, kind: input, shape index: {}]
  %s7 = inlined_call_operand.vmem [shape: f32[1,32], index: 7, kind: input, shape index: {}]
  %s8 = inlined_call_operand.vmem [shape: bf16[32,8], index: 8, kind: input, shape index: {}]
  %s9 = inlined_call_operand.vmem [shape: f32[1,8], index: 9, kind: input, shape index: {}]
  %s10 = inlined_call_operand.vmem [shape: bf16[8,2], index: 10, kind: input, shape index: {}]
  %s11 = inlined_call_operand.hbm [shape: f32[1,2], index: 11, kind: input, shape index: {}]
  %s12 = inlined_call_operand.vmem [shape: f32[8,2], index: 12, kind: output, shape index: {}]
  %s13 = sld [smem:[#allocation0]]
  $region66: #{mlp_classifier_forward.1} parent=0
    _
  %s15 = ssub.s32 1, %s13
  %s16 = scalar_select 0, %s15, %s13
  $region1: #{mlp_classifier_forward.1} parent=0
    #allocation2 [shape = 'u8[131072]{0}', space=vmem, size = 0x20000, scoped, tag = 'input window, operand 1, single buffered']
    #allocation3 [shape = 's32[1]{0}', space=sflag, size = 0x4, scoped, tag = 'scoped memory for mlp_classifier_forward.1']
    #allocation4 [shape = 'u8[512]{0}', space=vmem, size = 0x400, scoped, tag = 'input window, operand 11, single buffered']
    #allocation5 [shape = 's32[1]{0}', space=sflag, size = 0x4, scoped, tag = 'scoped memory for mlp_classifier_forward.1']
    %17 = vsyncpa [#allocation3], 0
    %18 = vsyncpa [#allocation5], 0
    // Predicated region
    $region2: #{mlp_classifier_forward.1} parent=1 // pred_check
      _
    $region3: #{mlp_classifier_forward.1} parent=1 // pred_check_branch
      %20 = sbr.rel (0) target = $region5
    $region4: #{mlp_classifier_forward.1} parent=1 // pred_region
      _
    $region5: #{mlp_classifier_forward.1} parent=1 // pred_fallthru
      _
    // Predicated region
    $region6: #{mlp_classifier_forward.1} parent=1 // pred_check
      _
    $region7: #{mlp_classifier_forward.1} parent=1 // pred_check_branch
      %22 = sbr.rel (0) target = $region9
    $region8: #{mlp_classifier_forward.1} parent=1 // pred_region
      %s24 = ssub.s32 4096, 4096
      %25 = vsyncadd [#allocation3], %s24
      %s26 = sshll.u32 [#allocation2], 4
      %s27 = int_to_ptr.vmem [resolvable:$true] %s26
      %32 = dma.hbm_to_vmem [thread:$0]  %s1, 4096, %s27, [#allocation3], 128, 128, 8
    $region9: #{mlp_classifier_forward.1} parent=1 // pred_fallthru
      _
    // Predicated region
    $region10: #{mlp_classifier_forward.1} parent=1 // pred_check
      _
    $region11: #{mlp_classifier_forward.1} parent=1 // pred_check_branch
      %34 = sbr.rel (0) target = $region13
    $region12: #{mlp_classifier_forward.1} parent=1 // pred_region
      _
    $region13: #{mlp_classifier_forward.1} parent=1 // pred_fallthru
      _
    // Predicated region
    $region14: #{mlp_classifier_forward.1} parent=1 // pred_check
      _
    $region15: #{mlp_classifier_forward.1} parent=1 // pred_check_branch
      %36 = sbr.rel (0) target = $region17
    $region16: #{mlp_classifier_forward.1} parent=1 // pred_region
      _
    $region17: #{mlp_classifier_forward.1} parent=1 // pred_fallthru
      _
    // Predicated region
    $region18: #{mlp_classifier_forward.1} parent=1 // pred_check
      _
    $region19: #{mlp_classifier_forward.1} parent=1 // pred_check_branch
      %38 = sbr.rel (0) target = $region21
    $region20: #{mlp_classifier_forward.1} parent=1 // pred_region
      _
    $region21: #{mlp_classifier_forward.1} parent=1 // pred_fallthru
      _
    // Predicated region
    $region22: #{mlp_classifier_forward.1} parent=1 // pred_check
      _
    $region23: #{mlp_classifier_forward.1} parent=1 // pred_check_branch
      %40 = sbr.rel (0) target = $region25
    $region24: #{mlp_classifier_forward.1} parent=1 // pred_region
      _
    $region25: #{mlp_classifier_forward.1} parent=1 // pred_fallthru
      _
    // Predicated region
    $region26: #{mlp_classifier_forward.1} parent=1 // pred_check
      _
    $region27: #{mlp_classifier_forward.1} parent=1 // pred_check_branch
      %42 = sbr.rel (0) target = $region29
    $region28: #{mlp_classifier_forward.1} parent=1 // pred_region
      _
    $region29: #{mlp_classifier_forward.1} parent=1 // pred_fallthru
      _
    // Predicated region
    $region30: #{mlp_classifier_forward.1} parent=1 // pred_check
      _
    $region31: #{mlp_classifier_forward.1} parent=1 // pred_check_branch
      %44 = sbr.rel (0) target = $region33
    $region32: #{mlp_classifier_forward.1} parent=1 // pred_region
      _
    $region33: #{mlp_classifier_forward.1} parent=1 // pred_fallthru
      _
    // Predicated region
    $region34: #{mlp_classifier_forward.1} parent=1 // pred_check
      _
    $region35: #{mlp_classifier_forward.1} parent=1 // pred_check_branch
      %46 = sbr.rel (0) target = $region37
    $region36: #{mlp_classifier_forward.1} parent=1 // pred_region
      _
    $region37: #{mlp_classifier_forward.1} parent=1 // pred_fallthru
      _
    // Predicated region
    $region38: #{mlp_classifier_forward.1} parent=1 // pred_check
      _
    $region39: #{mlp_classifier_forward.1} parent=1 // pred_check_branch
      %48 = sbr.rel (0) target = $region41
    $region40: #{mlp_classifier_forward.1} parent=1 // pred_region
      _
    $region41: #{mlp_classifier_forward.1} parent=1 // pred_fallthru
      _
    // Predicated region
    $region42: #{mlp_classifier_forward.1} parent=1 // pred_check
      _
    $region43: #{mlp_classifier_forward.1} parent=1 // pred_check_branch
      %50 = sbr.rel (0) target = $region45
    $region44: #{mlp_classifier_forward.1} parent=1 // pred_region
      _
    $region45: #{mlp_classifier_forward.1} parent=1 // pred_fallthru
      _
    // Predicated region
    $region46: #{mlp_classifier_forward.1} parent=1 // pred_check
      _
    $region47: #{mlp_classifier_forward.1} parent=1 // pred_check_branch
      %52 = sbr.rel (0) target = $region49
    $region48: #{mlp_classifier_forward.1} parent=1 // pred_region
      %s54 = ssub.s32 16, 16
      %55 = vsyncadd [#allocation5], %s54
      %s57 = sshll.u32 [#allocation4], 4
      %s58 = int_to_ptr.vmem [resolvable:$true] %s57
      %60 = dma.hbm_to_vmem [thread:$0]  %s11, 16, %s58, [#allocation5]
    $region49: #{mlp_classifier_forward.1} parent=1 // pred_fallthru
      _
    // Predicated region
    $region50: #{mlp_classifier_forward.1} parent=1 // pred_check
      _
    $region51: #{mlp_classifier_forward.1} parent=1 // pred_check_branch
      %62 = sbr.rel (0) target = $region53
    $region52: #{mlp_classifier_forward.1} parent=1 // pred_region
      %63 = dma.done [#allocation3], 4096
    $region53: #{mlp_classifier_forward.1} parent=1 // pred_fallthru
      _
    // Predicated region
    $region54: #{mlp_classifier_forward.1} parent=1 // pred_check
      _
    $region55: #{mlp_classifier_forward.1} parent=1 // pred_check_branch
      %65 = sbr.rel (0) target = $region57
    $region56: #{mlp_classifier_forward.1} parent=1 // pred_region
      %66 = dma.done [#allocation5], 16
    $region57: #{mlp_classifier_forward.1} parent=1 // pred_fallthru
      _
    %v68 = vld [vmem:[%s0] sm:$0xff]
    %v69 = vcvt.f32.s32.to.zero.pseudo %v68
    %v70 = vpack.c.bf16 %v68, %v68
    %v71 = vlaneseq
    %v72 = vand.u32 %v71, 127
    %v73 = vmul.u32 %v72, 20
    %v74 = vadd.s32 %v69, %v73
    %v75 = vadd.s32 %v72, 128
    %76 = vset.pattern.permute.xlu0 0
    %77 = vperm.xlu0 %76, %v74
    %v78 = vpop.permute.xlu0 %77
    %vm79 = vcmp.eq.s32.totalorder %v72, %v78
    %vm80 = vcmp.eq.s32.totalorder %v75, %v78
    %81 = vset.pattern.permute.xlu0 1
    %82 = vperm.xlu0 %81, %v74
    %v83 = vpop.permute.xlu0 %82
    %vm84 = vcmp.eq.s32.totalorder %v72, %v83
    %vm85 = vcmp.eq.s32.totalorder %v75, %v83
    %vm86 = vmor %vm79, %vm84
    %vm87 = vmor %vm80, %vm85
    %88 = vset.pattern.permute.xlu0 2
    %89 = vperm.xlu0 %88, %v74
    %v90 = vpop.permute.xlu0 %89
    %vm91 = vcmp.eq.s32.totalorder %v72, %v90
    %vm92 = vcmp.eq.s32.totalorder %v75, %v90
    %vm93 = vmor %vm86, %vm91
    %vm94 = vmor %vm87, %vm92
    %95 = vset.pattern.permute.xlu0 3
    %96 = vperm.xlu0 %95, %v74
    %v97 = vpop.permute.xlu0 %96
    %vm98 = vcmp.eq.s32.totalorder %v72, %v97
    %vm99 = vcmp.eq.s32.totalorder %v75, %v97
    %vm100 = vmor %vm93, %vm98
    %vm101 = vmor %vm94, %vm99
    %102 = vset.pattern.permute.xlu0 4
    %103 = vperm.xlu0 %102, %v74
    %v104 = vpop.permute.xlu0 %103
    %vm105 = vcmp.eq.s32.totalorder %v72, %v104
    %vm106 = vcmp.eq.s32.totalorder %v75, %v104
    %vm107 = vmor %vm100, %vm105
    %vm108 = vmor %vm101, %vm106
    %109 = vset.pattern.permute.xlu0 5
    %110 = vperm.xlu0 %109, %v74
    %v111 = vpop.permute.xlu0 %110
    %vm112 = vcmp.eq.s32.totalorder %v72, %v111
    %vm113 = vcmp.eq.s32.totalorder %v75, %v111
    %vm114 = vmor %vm107, %vm112
    %vm115 = vmor %vm108, %vm113
    %116 = vset.pattern.permute.xlu0 6
    %117 = vperm.xlu0 %116, %v74
    %v118 = vpop.permute.xlu0 %117
    %vm119 = vcmp.eq.s32.totalorder %v72, %v118
    %vm120 = vcmp.eq.s32.totalorder %v75, %v118
    %vm121 = vmor %vm114, %vm119
    %vm122 = vmor %vm115, %vm120
    %123 = vset.pattern.permute.xlu0 7
    %124 = vperm.xlu0 %123, %v74
    %v125 = vpop.permute.xlu0 %124
    %vm126 = vcmp.eq.s32.totalorder %v72, %v125
    %vm127 = vcmp.eq.s32.totalorder %v75, %v125
    %vm128 = vmor %vm121, %vm126
    %vm129 = vmor %vm122, %vm127
    %130 = vset.pattern.permute.xlu0 8
    %131 = vperm.xlu0 %130, %v74
    %v132 = vpop.permute.xlu0 %131
    %vm133 = vcmp.eq.s32.totalorder %v72, %v132
    %vm134 = vcmp.eq.s32.totalorder %v75, %v132
    %vm135 = vmor %vm128, %vm133
    %vm136 = vmor %vm129, %vm134
    %137 = vset.pattern.permute.xlu0 9
    %138 = vperm.xlu0 %137, %v74
    %v139 = vpop.permute.xlu0 %138
    %vm140 = vcmp.eq.s32.totalorder %v72, %v139
    %vm141 = vcmp.eq.s32.totalorder %v75, %v139
    %vm142 = vmor %vm135, %vm140
    %vm143 = vmor %vm136, %vm141
    %144 = vset.pattern.permute.xlu0 10
    %145 = vperm.xlu0 %144, %v74
    %v146 = vpop.permute.xlu0 %145
    %vm147 = vcmp.eq.s32.totalorder %v72, %v146
    %vm148 = vcmp.eq.s32.totalorder %v75, %v146
    %vm149 = vmor %vm142, %vm147
    %vm150 = vmor %vm143, %vm148
    %151 = vset.pattern.permute.xlu0 11
    %152 = vperm.xlu0 %151, %v74
    %v153 = vpop.permute.xlu0 %152
    %vm154 = vcmp.eq.s32.totalorder %v72, %v153
    %vm155 = vcmp.eq.s32.totalorder %v75, %v153
    %vm156 = vmor %vm149, %vm154
    %vm157 = vmor %vm150, %vm155
    %v158 = vsel %vm156, 1.0, 0.0
    %v159 = vsel %vm157, 1.0, 0.0
    %v160 = vpack.c.bf16 %v158, %v158
    %v161 = vpack.c.bf16 %v159, %v159
    %v162 = vld [vmem:[#allocation2] sm:$0xff]
    %v163 = vld [vmem:[#allocation2 + $0x8] sm:$0xff]
    %v164 = vld [vmem:[#allocation2 + $0x10] sm:$0xff]
    %v165 = vld [vmem:[#allocation2 + $0x18] sm:$0xff]
    %v166 = vld [vmem:[#allocation2 + $0x20] sm:$0xff]
    %v167 = vld [vmem:[#allocation2 + $0x28] sm:$0xff]
    %v168 = vld [vmem:[#allocation2 + $0x30] sm:$0xff]
    %v169 = vld [vmem:[#allocation2 + $0x38] sm:$0xff]
    %v170 = vld [vmem:[#allocation2 + $0x40] sm:$0xff]
    %v171 = vld [vmem:[#allocation2 + $0x48] sm:$0xff]
    %v172 = vld [vmem:[#allocation2 + $0x50] sm:$0xff]
    %v173 = vld [vmem:[#allocation2 + $0x58] sm:$0xff]
    %v174 = vld [vmem:[#allocation2 + $0x60] sm:$0xff]
    %v175 = vld [vmem:[#allocation2 + $0x68] sm:$0xff]
    %v176 = vld [vmem:[#allocation2 + $0x70] sm:$0xff]
    %v177 = vld [vmem:[#allocation2 + $0x78] sm:$0xff]
    %v178 = vld [vmem:[#allocation2 + $0x80] sm:$0xff]
    %v179 = vld [vmem:[#allocation2 + $0x88] sm:$0xff]
    %v180 = vld [vmem:[#allocation2 + $0x90] sm:$0xff]
    %v181 = vld [vmem:[#allocation2 + $0x98] sm:$0xff]
    %v182 = vld [vmem:[#allocation2 + $0xa0] sm:$0xff]
    %v183 = vld [vmem:[#allocation2 + $0xa8] sm:$0xff]
    %v184 = vld [vmem:[#allocation2 + $0xb0] sm:$0xff]
    %v185 = vld [vmem:[#allocation2 + $0xb8] sm:$0xff]
    %v186 = vld [vmem:[#allocation2 + $0xc0] sm:$0xff]
    %v187 = vld [vmem:[#allocation2 + $0xc8] sm:$0xff]
    %v188 = vld [vmem:[#allocation2 + $0xd0] sm:$0xff]
    %v189 = vld [vmem:[#allocation2 + $0xd8] sm:$0xff]
    %v190 = vld [vmem:[#allocation2 + $0xe0] sm:$0xff]
    %v191 = vld [vmem:[#allocation2 + $0xe8] sm:$0xff]
    %v192 = vld [vmem:[#allocation2 + $0xf0] sm:$0xff]
    %v193 = vld [vmem:[#allocation2 + $0xf8] sm:$0xff]
    %v194 = vld [vmem:[%s2] sm:$0xf]
    %196 = vrot.lane.b32.xlu0 %v70, 116
    %v197 = vpop.permute.xlu0 %196
    %v200 = vunpack.c.l.s4 1983009808
    %v201 = vunpack.c.0.s8 %v200
    %v202 = vlaneseq
    %v203 = vshrl.u32 %v202, 7
    %v204 = vsub.s32 %v201, %v203
    %v205 = vrot.slane %v194, %v204
    %v206 = vcombine.high %v205, %v205
    %vm207 = vcmask 31744
    %v209 = vsel %vm207, %v197, 0
    %vm211 = vcmask 1041408
    %v213 = vsel %vm211, %v205, 0
    %v216 = vsel %vm211, %v206, 0
    %218 = vmatprep.subr.bf16.mxu0 %v216
    %219 = vmatpush1.bf16.msra.mxu0 %v213
    %220 = vmatprep.subr.bf16.mxu0 0
    %221 = vmatpush1.bf16.msra.mxu0 0
    %222 = vmatprep.subr.bf16.mxu0 0
    %223 = vmatpush1.bf16.msra.mxu0 0
    %224 = vmatprep.subr.bf16.mxu0 0
    %225 = vmatpush1.bf16.msra.mxu0 0
    %226 = vmatprep.subr.bf16.mxu0 0
    %227 = vmatpush1.bf16.msra.mxu0 0
    %228 = vmatprep.subr.bf16.mxu0 0
    %229 = vmatpush1.bf16.msra.mxu0 0
    %230 = vmatprep.subr.bf16.mxu0 0
    %231 = vmatpush1.bf16.msra.mxu0 0
    %232 = vmatprep.subr.bf16.mxu0 0
    %233 = vmatpush1.bf16.msra.mxu0 0
    %234 = vmatprep.subr.bf16.mxu0 0
    %235 = vmatpush1.bf16.msra.mxu0 0
    %236 = vmatprep.subr.bf16.mxu0 0
    %237 = vmatpush1.bf16.msra.mxu0 0
    %238 = vmatprep.subr.bf16.mxu0 0
    %239 = vmatpush1.bf16.msra.mxu0 0
    %240 = vmatprep.subr.bf16.mxu0 0
    %241 = vmatpush1.bf16.msra.mxu0 0
    %242 = vmatprep.subr.bf16.mxu0 0
    %243 = vmatpush1.bf16.msra.mxu0 0
    %244 = vmatprep.subr.bf16.mxu0 0
    %245 = vmatpush1.bf16.msra.mxu0 0
    %246 = vmatprep.subr.bf16.mxu0 0
    %247 = vmatpush1.bf16.msra.mxu0 0
    %248 = vmatprep.subr.bf16.mxu0 0
    %249 = vmatpush1.bf16.msra.mxu0 0
    %250 = vmatprep.mubr.bf16.mxu0 0
    %251 = vmatmul.mubr.bf16.gmra.mrb[0].mxu0 %v209
    %v252 = vpop.f32.mrb[0].mxu0
    %v253 = vadd.f32 0.0, %v252
    %v254 = vpop.f32.mrb[0].mxu0
    %v255 = vadd.f32 0.0, %v254
    %v256 = vpop.f32.mrb[0].mxu0
    %v257 = vpop.f32.mrb[0].mxu0
    %258 = vdwg.mxu0
    %v291 = vunpack.c.l.b16 %v162
    %v292 = vunpack.c.h.b16 %v162
    %v293 = vunpack.c.l.b16 %v163
    %v294 = vunpack.c.h.b16 %v163
    %v295 = vunpack.c.l.b16 %v164
    %v296 = vunpack.c.h.b16 %v164
    %v297 = vunpack.c.l.b16 %v165
    %v298 = vunpack.c.h.b16 %v165
    %v299 = vunpack.c.l.b16 %v166
    %v300 = vunpack.c.h.b16 %v166
    %v301 = vunpack.c.l.b16 %v167
    %v302 = vunpack.c.h.b16 %v167
    %v303 = vunpack.c.l.b16 %v168
    %v304 = vunpack.c.h.b16 %v168
    %v305 = vunpack.c.l.b16 %v169
    %v306 = vunpack.c.h.b16 %v169
    %v307 = vunpack.c.l.b16 %v170
    %v308 = vunpack.c.h.b16 %v170
    %v309 = vunpack.c.l.b16 %v171
    %v310 = vunpack.c.h.b16 %v171
    %v311 = vunpack.c.l.b16 %v172
    %v312 = vunpack.c.h.b16 %v172
    %v313 = vunpack.c.l.b16 %v173
    %v314 = vunpack.c.h.b16 %v173
    %v315 = vunpack.c.l.b16 %v174
    %v316 = vunpack.c.h.b16 %v174
    %v317 = vunpack.c.l.b16 %v175
    %v318 = vunpack.c.h.b16 %v175
    %v319 = vunpack.c.l.b16 %v176
    %v320 = vunpack.c.h.b16 %v176
    %v321 = vunpack.c.l.b16 %v177
    %v322 = vunpack.c.h.b16 %v177
    %v323 = vunpack.c.l.b16 %v178
    %v324 = vunpack.c.h.b16 %v178
    %v325 = vunpack.c.l.b16 %v179
    %v326 = vunpack.c.h.b16 %v179
    %v327 = vunpack.c.l.b16 %v180
    %v328 = vunpack.c.h.b16 %v180
    %v329 = vunpack.c.l.b16 %v181
    %v330 = vunpack.c.h.b16 %v181
    %v331 = vunpack.c.l.b16 %v182
    %v332 = vunpack.c.h.b16 %v182
    %v333 = vunpack.c.l.b16 %v183
    %v334 = vunpack.c.h.b16 %v183
    %v335 = vunpack.c.l.b16 %v184
    %v336 = vunpack.c.h.b16 %v184
    %v337 = vunpack.c.l.b16 %v185
    %v338 = vunpack.c.h.b16 %v185
    %v339 = vunpack.c.l.b16 %v186
    %v340 = vunpack.c.h.b16 %v186
    %v341 = vunpack.c.l.b16 %v187
    %v342 = vunpack.c.h.b16 %v187
    %v343 = vunpack.c.l.b16 %v188
    %v344 = vunpack.c.h.b16 %v188
    %v345 = vunpack.c.l.b16 %v189
    %v346 = vunpack.c.h.b16 %v189
    %v347 = vunpack.c.l.b16 %v190
    %v348 = vunpack.c.h.b16 %v190
    %v349 = vunpack.c.l.b16 %v191
    %v350 = vunpack.c.h.b16 %v191
    %v351 = vunpack.c.l.b16 %v192
    %v352 = vunpack.c.h.b16 %v192
    %v353 = vunpack.c.l.b16 %v193
    %v354 = vunpack.c.h.b16 %v193
    %v355 = vpack.c.b16 %v293, %v291
    %v356 = vpack.c.b16 %v294, %v292
    %v357 = vpack.c.b16 %v297, %v295
    %v358 = vpack.c.b16 %v298, %v296
    %v359 = vpack.c.b16 %v301, %v299
    %v360 = vpack.c.b16 %v302, %v300
    %v361 = vpack.c.b16 %v305, %v303
    %v362 = vpack.c.b16 %v306, %v304
    %v363 = vpack.c.b16 %v309, %v307
    %v364 = vpack.c.b16 %v310, %v308
    %v365 = vpack.c.b16 %v313, %v311
    %v366 = vpack.c.b16 %v314, %v312
    %v367 = vpack.c.b16 %v317, %v315
    %v368 = vpack.c.b16 %v318, %v316
    %v369 = vpack.c.b16 %v321, %v319
    %v370 = vpack.c.b16 %v322, %v320
    %v371 = vpack.c.b16 %v325, %v323
    %v372 = vpack.c.b16 %v326, %v324
    %v373 = vpack.c.b16 %v329, %v327
    %v374 = vpack.c.b16 %v330, %v328
    %v375 = vpack.c.b16 %v333, %v331
    %v376 = vpack.c.b16 %v334, %v332
    %v377 = vpack.c.b16 %v337, %v335
    %v378 = vpack.c.b16 %v338, %v336
    %v379 = vpack.c.b16 %v341, %v339
    %v380 = vpack.c.b16 %v342, %v340
    %v381 = vpack.c.b16 %v345, %v343
    %v382 = vpack.c.b16 %v346, %v344
    %v383 = vpack.c.b16 %v349, %v347
    %v384 = vpack.c.b16 %v350, %v348
    %v385 = vpack.c.b16 %v353, %v351
    %v386 = vpack.c.b16 %v354, %v352
    %419 = vmatprep.subr.bf16.mxu0 %v356
    %420 = vmatpush1.bf16.msra.mxu0 %v355
    %421 = vmatprep.subr.bf16.mxu0 %v358
    %422 = vmatpush1.bf16.msra.mxu0 %v357
    %423 = vmatprep.subr.bf16.mxu0 %v360
    %424 = vmatpush1.bf16.msra.mxu0 %v359
    %425 = vmatprep.subr.bf16.mxu0 %v362
    %426 = vmatpush1.bf16.msra.mxu0 %v361
    %427 = vmatprep.subr.bf16.mxu0 %v364
    %428 = vmatpush1.bf16.msra.mxu0 %v363
    %429 = vmatprep.subr.bf16.mxu0 %v366
    %430 = vmatpush1.bf16.msra.mxu0 %v365
    %431 = vmatprep.subr.bf16.mxu0 %v368
    %432 = vmatpush1.bf16.msra.mxu0 %v367
    %433 = vmatprep.subr.bf16.mxu0 %v370
    %434 = vmatpush1.bf16.msra.mxu0 %v369
    %435 = vmatprep.subr.bf16.mxu0 %v372
    %436 = vmatpush1.bf16.msra.mxu0 %v371
    %437 = vmatprep.subr.bf16.mxu0 %v374
    %438 = vmatpush1.bf16.msra.mxu0 %v373
    %439 = vmatprep.subr.bf16.mxu0 %v376
    %440 = vmatpush1.bf16.msra.mxu0 %v375
    %441 = vmatprep.subr.bf16.mxu0 %v378
    %442 = vmatpush1.bf16.msra.mxu0 %v377
    %443 = vmatprep.subr.bf16.mxu0 %v380
    %444 = vmatpush1.bf16.msra.mxu0 %v379
    %445 = vmatprep.subr.bf16.mxu0 %v382
    %446 = vmatpush1.bf16.msra.mxu0 %v381
    %447 = vmatprep.subr.bf16.mxu0 %v384
    %448 = vmatpush1.bf16.msra.mxu0 %v383
    %449 = vmatprep.subr.bf16.mxu0 %v386
    %450 = vmatpush1.bf16.msra.mxu0 %v385
    %451 = vmatprep.mubr.bf16.mxu0 %v161
    %452 = vmatmul.mubr.bf16.gmra.mrb[0].mxu0 %v160
    %v453 = vpop.f32.mrb[0].mxu0
    %v454 = vadd.f32 %v253, %v453
    %v455 = vpop.f32.mrb[0].mxu0
    %v456 = vadd.f32 %v255, %v455
    %v457 = vpop.f32.mrb[0].mxu0
    %v458 = vpop.f32.mrb[0].mxu0
    %459 = vdwg.mxu0
    %v460 = vld [vmem:[%s3] sm:$0x3]
    %v462 = vlaneseq
    %v463 = vshrl.u32 %v462, 7
    %v464 = vsub.s32 0, %v463
    %v465 = vrot.slane %v460, %v464
    %v466 = vlaneseq
    %v467 = vshrl.u32 %v466, 7
    %v468 = vsub.s32 1, %v467
    %v469 = vrot.slane %v460, %v468
    %v472 = vadd.f32 %v454, %v465
    %v473 = vadd.f32 %v456, %v469
    %v474 = vmax.f32 %v472, 0.0
    %v475 = vmax.f32 %v473, 0.0
    %v476 = vpack.c.bf16 %v474, %v474
    %v477 = vpack.c.bf16 %v475, %v475
    %v478 = vld [vmem:[%s4] sm:$0xf]
    %v479 = vld [vmem:[%s4 + $0x4] sm:$0xf]
    %v480 = vld [vmem:[%s4 + $0x8] sm:$0xf]
    %v481 = vld [vmem:[%s4 + $0xc] sm:$0xf]
    %v482 = vld [vmem:[%s4 + $0x10] sm:$0xf]
    %v483 = vld [vmem:[%s4 + $0x14] sm:$0xf]
    %v484 = vld [vmem:[%s4 + $0x18] sm:$0xf]
    %v485 = vld [vmem:[%s4 + $0x1c] sm:$0xf]
    %v486 = vld [vmem:[%s4 + $0x20] sm:$0xf]
    %v487 = vld [vmem:[%s4 + $0x24] sm:$0xf]
    %v488 = vld [vmem:[%s4 + $0x28] sm:$0xf]
    %v489 = vld [vmem:[%s4 + $0x2c] sm:$0xf]
    %v490 = vld [vmem:[%s4 + $0x30] sm:$0xf]
    %v491 = vld [vmem:[%s4 + $0x34] sm:$0xf]
    %v492 = vld [vmem:[%s4 + $0x38] sm:$0xf]
    %v493 = vld [vmem:[%s4 + $0x3c] sm:$0xf]
    %v494 = vld [vmem:[%s4 + $0x40] sm:$0xf]
    %v495 = vld [vmem:[%s4 + $0x44] sm:$0xf]
    %v496 = vld [vmem:[%s4 + $0x48] sm:$0xf]
    %v497 = vld [vmem:[%s4 + $0x4c] sm:$0xf]
    %v498 = vld [vmem:[%s4 + $0x50] sm:$0xf]
    %v499 = vld [vmem:[%s4 + $0x54] sm:$0xf]
    %v500 = vld [vmem:[%s4 + $0x58] sm:$0xf]
    %v501 = vld [vmem:[%s4 + $0x5c] sm:$0xf]
    %v502 = vld [vmem:[%s4 + $0x60] sm:$0xf]
    %v503 = vld [vmem:[%s4 + $0x64] sm:$0xf]
    %v504 = vld [vmem:[%s4 + $0x68] sm:$0xf]
    %v505 = vld [vmem:[%s4 + $0x6c] sm:$0xf]
    %v506 = vld [vmem:[%s4 + $0x70] sm:$0xf]
    %v507 = vld [vmem:[%s4 + $0x74] sm:$0xf]
    %v508 = vld [vmem:[%s4 + $0x78] sm:$0xf]
    %v509 = vld [vmem:[%s4 + $0x7c] sm:$0xf]
    %v510 = vld [vmem:[%s5] sm:$0x1]
    %v512 = vlaneseq
    %v513 = vshrl.u32 %v512, 7
    %v514 = vsub.s32 0, %v513
    %v515 = vrot.slane %v510, %v514
    %v549 = vunpack.c.l.b16 %v478
    %v550 = vunpack.c.l.b16 %v479
    %v551 = vunpack.c.l.b16 %v480
    %v552 = vunpack.c.l.b16 %v481
    %v553 = vunpack.c.l.b16 %v482
    %v554 = vunpack.c.l.b16 %v483
    %v555 = vunpack.c.l.b16 %v484
    %v556 = vunpack.c.l.b16 %v485
    %v557 = vunpack.c.l.b16 %v486
    %v558 = vunpack.c.l.b16 %v487
    %v559 = vunpack.c.l.b16 %v488
    %v560 = vunpack.c.l.b16 %v489
    %v561 = vunpack.c.l.b16 %v490
    %v562 = vunpack.c.l.b16 %v491
    %v563 = vunpack.c.l.b16 %v492
    %v564 = vunpack.c.l.b16 %v493
    %v565 = vunpack.c.l.b16 %v494
    %v566 = vunpack.c.l.b16 %v495
    %v567 = vunpack.c.l.b16 %v496
    %v568 = vunpack.c.l.b16 %v497
    %v569 = vunpack.c.l.b16 %v498
    %v570 = vunpack.c.l.b16 %v499
    %v571 = vunpack.c.l.b16 %v500
    %v572 = vunpack.c.l.b16 %v501
    %v573 = vunpack.c.l.b16 %v502
    %v574 = vunpack.c.l.b16 %v503
    %v575 = vunpack.c.l.b16 %v504
    %v576 = vunpack.c.l.b16 %v505
    %v577 = vunpack.c.l.b16 %v506
    %v578 = vunpack.c.l.b16 %v507
    %v579 = vunpack.c.l.b16 %v508
    %v580 = vunpack.c.l.b16 %v509
    %v581 = vpack.c.b16 %v550, %v549
    %v582 = vpack.c.b16 %v552, %v551
    %v583 = vpack.c.b16 %v554, %v553
    %v584 = vpack.c.b16 %v556, %v555
    %v585 = vpack.c.b16 %v558, %v557
    %v586 = vpack.c.b16 %v560, %v559
    %v587 = vpack.c.b16 %v562, %v561
    %v588 = vpack.c.b16 %v564, %v563
    %v589 = vpack.c.b16 %v566, %v565
    %v590 = vpack.c.b16 %v568, %v567
    %v591 = vpack.c.b16 %v570, %v569
    %v592 = vpack.c.b16 %v572, %v571
    %v593 = vpack.c.b16 %v574, %v573
    %v594 = vpack.c.b16 %v576, %v575
    %v595 = vpack.c.b16 %v578, %v577
    %v596 = vpack.c.b16 %v580, %v579
    %613 = vmatprep.subr.bf16.mxu0 0
    %614 = vmatpush1.bf16.msra.mxu0 %v581
    %615 = vmatprep.subr.bf16.mxu0 0
    %616 = vmatpush1.bf16.msra.mxu0 %v582
    %617 = vmatprep.subr.bf16.mxu0 0
    %618 = vmatpush1.bf16.msra.mxu0 %v583
    %619 = vmatprep.subr.bf16.mxu0 0
    %620 = vmatpush1.bf16.msra.mxu0 %v584
    %621 = vmatprep.subr.bf16.mxu0 0
    %622 = vmatpush1.bf16.msra.mxu0 %v585
    %623 = vmatprep.subr.bf16.mxu0 0
    %624 = vmatpush1.bf16.msra.mxu0 %v586
    %625 = vmatprep.subr.bf16.mxu0 0
    %626 = vmatpush1.bf16.msra.mxu0 %v587
    %627 = vmatprep.subr.bf16.mxu0 0
    %628 = vmatpush1.bf16.msra.mxu0 %v588
    %629 = vmatprep.subr.bf16.mxu0 0
    %630 = vmatpush1.bf16.msra.mxu0 %v589
    %631 = vmatprep.subr.bf16.mxu0 0
    %632 = vmatpush1.bf16.msra.mxu0 %v590
    %633 = vmatprep.subr.bf16.mxu0 0
    %634 = vmatpush1.bf16.msra.mxu0 %v591
    %635 = vmatprep.subr.bf16.mxu0 0
    %636 = vmatpush1.bf16.msra.mxu0 %v592
    %637 = vmatprep.subr.bf16.mxu0 0
    %638 = vmatpush1.bf16.msra.mxu0 %v593
    %639 = vmatprep.subr.bf16.mxu0 0
    %640 = vmatpush1.bf16.msra.mxu0 %v594
    %641 = vmatprep.subr.bf16.mxu0 0
    %642 = vmatpush1.bf16.msra.mxu0 %v595
    %643 = vmatprep.subr.bf16.mxu0 0
    %644 = vmatpush1.bf16.msra.mxu0 %v596
    %645 = vmatprep.mubr.bf16.mxu0 %v477
    %646 = vmatmul.mubr.bf16.gmra.mrb[0].mxu0 %v476
    %v647 = vpop.f32.mrb[0].mxu0
    %v648 = vadd.f32 %v515, %v647
    %v649 = vpop.f32.mrb[0].mxu0
    %v650 = vpop.f32.mrb[0].mxu0
    %v651 = vpop.f32.mrb[0].mxu0
    %652 = vdwg.mxu0
    %v653 = vmax.f32 %v648, 0.0
    %v654 = vpack.c.bf16 %v653, %v653
    %v655 = vld [vmem:[%s6] sm:$0xf]
    %v656 = vld [vmem:[%s6 + $0x4] sm:$0xf]
    %v657 = vld [vmem:[%s6 + $0x8] sm:$0xf]
    %v658 = vld [vmem:[%s6 + $0xc] sm:$0xf]
    %v659 = vld [vmem:[%s6 + $0x10] sm:$0xf]
    %v660 = vld [vmem:[%s6 + $0x14] sm:$0xf]
    %v661 = vld [vmem:[%s6 + $0x18] sm:$0xf]
    %v662 = vld [vmem:[%s6 + $0x1c] sm:$0xf]
    %v663 = vld [vmem:[%s6 + $0x20] sm:$0xf]
    %v664 = vld [vmem:[%s6 + $0x24] sm:$0xf]
    %v665 = vld [vmem:[%s6 + $0x28] sm:$0xf]
    %v666 = vld [vmem:[%s6 + $0x2c] sm:$0xf]
    %v667 = vld [vmem:[%s6 + $0x30] sm:$0xf]
    %v668 = vld [vmem:[%s6 + $0x34] sm:$0xf]
    %v669 = vld [vmem:[%s6 + $0x38] sm:$0xf]
    %v670 = vld [vmem:[%s6 + $0x3c] sm:$0xf]
    %v671 = vld [vmem:[%s7] sm:$0x1]
    %v673 = vlaneseq
    %v674 = vshrl.u32 %v673, 7
    %v675 = vsub.s32 0, %v674
    %v676 = vrot.slane %v671, %v675
    %v694 = vunpack.c.l.b16 %v655
    %v695 = vunpack.c.l.b16 %v656
    %v696 = vunpack.c.l.b16 %v657
    %v697 = vunpack.c.l.b16 %v658
    %v698 = vunpack.c.l.b16 %v659
    %v699 = vunpack.c.l.b16 %v660
    %v700 = vunpack.c.l.b16 %v661
    %v701 = vunpack.c.l.b16 %v662
    %v702 = vunpack.c.l.b16 %v663
    %v703 = vunpack.c.l.b16 %v664
    %v704 = vunpack.c.l.b16 %v665
    %v705 = vunpack.c.l.b16 %v666
    %v706 = vunpack.c.l.b16 %v667
    %v707 = vunpack.c.l.b16 %v668
    %v708 = vunpack.c.l.b16 %v669
    %v709 = vunpack.c.l.b16 %v670
    %v710 = vpack.c.b16 %v695, %v694
    %v711 = vpack.c.b16 %v697, %v696
    %v712 = vpack.c.b16 %v699, %v698
    %v713 = vpack.c.b16 %v701, %v700
    %v714 = vpack.c.b16 %v703, %v702
    %v715 = vpack.c.b16 %v705, %v704
    %v716 = vpack.c.b16 %v707, %v706
    %v717 = vpack.c.b16 %v709, %v708
    %726 = vmatprep.subr.bf16.mxu0 0
    %727 = vmatpush1.bf16.msra.mxu0 %v710
    %728 = vmatprep.subr.bf16.mxu0 0
    %729 = vmatpush1.bf16.msra.mxu0 %v711
    %730 = vmatprep.subr.bf16.mxu0 0
    %731 = vmatpush1.bf16.msra.mxu0 %v712
    %732 = vmatprep.subr.bf16.mxu0 0
    %733 = vmatpush1.bf16.msra.mxu0 %v713
    %734 = vmatprep.subr.bf16.mxu0 0
    %735 = vmatpush1.bf16.msra.mxu0 %v714
    %736 = vmatprep.subr.bf16.mxu0 0
    %737 = vmatpush1.bf16.msra.mxu0 %v715
    %738 = vmatprep.subr.bf16.mxu0 0
    %739 = vmatpush1.bf16.msra.mxu0 %v716
    %740 = vmatprep.subr.bf16.mxu0 0
    %741 = vmatpush1.bf16.msra.mxu0 %v717
    %742 = vmatprep.subr.bf16.mxu0 0
    %743 = vmatpush1.bf16.msra.mxu0 0
    %744 = vmatprep.subr.bf16.mxu0 0
    %745 = vmatpush1.bf16.msra.mxu0 0
    %746 = vmatprep.subr.bf16.mxu0 0
    %747 = vmatpush1.bf16.msra.mxu0 0
    %748 = vmatprep.subr.bf16.mxu0 0
    %749 = vmatpush1.bf16.msra.mxu0 0
    %750 = vmatprep.subr.bf16.mxu0 0
    %751 = vmatpush1.bf16.msra.mxu0 0
    %752 = vmatprep.subr.bf16.mxu0 0
    %753 = vmatpush1.bf16.msra.mxu0 0
    %754 = vmatprep.subr.bf16.mxu0 0
    %755 = vmatpush1.bf16.msra.mxu0 0
    %756 = vmatprep.subr.bf16.mxu0 0
    %757 = vmatpush1.bf16.msra.mxu0 0
    %758 = vmatprep.mubr.bf16.mxu0 0
    %759 = vmatmul.mubr.bf16.gmra.mrb[0].mxu0 %v654
    %v760 = vpop.f32.mrb[0].mxu0
    %v761 = vadd.f32 %v676, %v760
    %v762 = vpop.f32.mrb[0].mxu0
    %v763 = vpop.f32.mrb[0].mxu0
    %v764 = vpop.f32.mrb[0].mxu0
    %765 = vdwg.mxu0
    %v766 = vmax.f32 %v761, 0.0
    %v767 = vpack.c.bf16 %v766, %v766
    %v768 = vld [vmem:[%s8] sm:$0xf]
    %v769 = vld [vmem:[%s8 + $0x4] sm:$0xf]
    %v770 = vld [vmem:[%s8 + $0x8] sm:$0xf]
    %v771 = vld [vmem:[%s8 + $0xc] sm:$0xf]
    %v772 = vld [vmem:[%s9] sm:$0x1]
    %v774 = vlaneseq
    %v775 = vshrl.u32 %v774, 7
    %v776 = vsub.s32 0, %v775
    %v777 = vrot.slane %v772, %v776
    %v783 = vunpack.c.l.b16 %v768
    %v784 = vunpack.c.l.b16 %v769
    %v785 = vunpack.c.l.b16 %v770
    %v786 = vunpack.c.l.b16 %v771
    %v787 = vpack.c.b16 %v784, %v783
    %v788 = vpack.c.b16 %v786, %v785
    %vm791 = vcmask 261120
    %v793 = vsel %vm791, %v767, 0
    %795 = vmatprep.subr.bf16.mxu0 0
    %796 = vmatpush1.bf16.msra.mxu0 %v787
    %797 = vmatprep.subr.bf16.mxu0 0
    %798 = vmatpush1.bf16.msra.mxu0 %v788
    %799 = vmatprep.subr.bf16.mxu0 0
    %800 = vmatpush1.bf16.msra.mxu0 0
    %801 = vmatprep.subr.bf16.mxu0 0
    %802 = vmatpush1.bf16.msra.mxu0 0
    %803 = vmatprep.subr.bf16.mxu0 0
    %804 = vmatpush1.bf16.msra.mxu0 0
    %805 = vmatprep.subr.bf16.mxu0 0
    %806 = vmatpush1.bf16.msra.mxu0 0
    %807 = vmatprep.subr.bf16.mxu0 0
    %808 = vmatpush1.bf16.msra.mxu0 0
    %809 = vmatprep.subr.bf16.mxu0 0
    %810 = vmatpush1.bf16.msra.mxu0 0
    %811 = vmatprep.subr.bf16.mxu0 0
    %812 = vmatpush1.bf16.msra.mxu0 0
    %813 = vmatprep.subr.bf16.mxu0 0
    %814 = vmatpush1.bf16.msra.mxu0 0
    %815 = vmatprep.subr.bf16.mxu0 0
    %816 = vmatpush1.bf16.msra.mxu0 0
    %817 = vmatprep.subr.bf16.mxu0 0
    %818 = vmatpush1.bf16.msra.mxu0 0
    %819 = vmatprep.subr.bf16.mxu0 0
    %820 = vmatpush1.bf16.msra.mxu0 0
    %821 = vmatprep.subr.bf16.mxu0 0
    %822 = vmatpush1.bf16.msra.mxu0 0
    %823 = vmatprep.subr.bf16.mxu0 0
    %824 = vmatpush1.bf16.msra.mxu0 0
    %825 = vmatprep.subr.bf16.mxu0 0
    %826 = vmatpush1.bf16.msra.mxu0 0
    %827 = vmatprep.mubr.bf16.mxu0 0
    %828 = vmatmul.mubr.bf16.gmra.mrb[0].mxu0 %v793
    %v829 = vpop.f32.mrb[0].mxu0
    %v830 = vadd.f32 %v777, %v829
    %v831 = vpop.f32.mrb[0].mxu0
    %v832 = vpop.f32.mrb[0].mxu0
    %v833 = vpop.f32.mrb[0].mxu0
    %834 = vdwg.mxu0
    %v835 = vmax.f32 %v830, 0.0
    %v836 = vpack.c.bf16 %v835, %v835
    %v837 = vld [vmem:[%s10] sm:$0xf]
    %v838 = vld [vmem:[#allocation4] sm:$0x1]
    %v840 = vlaneseq
    %v841 = vshrl.u32 %v840, 7
    %v842 = vsub.s32 0, %v841
    %v843 = vrot.slane %v838, %v842
    %vm845 = vcmask 64512
    %v847 = vsel %vm845, %v836, 0
    %vm849 = vcmask 1043456
    %v851 = vsel %vm849, %v837, 0
    %853 = vmatprep.subr.bf16.mxu0 0
    %854 = vmatpush1.bf16.msra.mxu0 %v851
    %855 = vmatprep.subr.bf16.mxu0 0
    %856 = vmatpush1.bf16.msra.mxu0 0
    %857 = vmatprep.subr.bf16.mxu0 0
    %858 = vmatpush1.bf16.msra.mxu0 0
    %859 = vmatprep.subr.bf16.mxu0 0
    %860 = vmatpush1.bf16.msra.mxu0 0
    %861 = vmatprep.subr.bf16.mxu0 0
    %862 = vmatpush1.bf16.msra.mxu0 0
    %863 = vmatprep.subr.bf16.mxu0 0
    %864 = vmatpush1.bf16.msra.mxu0 0
    %865 = vmatprep.subr.bf16.mxu0 0
    %866 = vmatpush1.bf16.msra.mxu0 0
    %867 = vmatprep.subr.bf16.mxu0 0
    %868 = vmatpush1.bf16.msra.mxu0 0
    %869 = vmatprep.subr.bf16.mxu0 0
    %870 = vmatpush1.bf16.msra.mxu0 0
    %871 = vmatprep.subr.bf16.mxu0 0
    %872 = vmatpush1.bf16.msra.mxu0 0
    %873 = vmatprep.subr.bf16.mxu0 0
    %874 = vmatpush1.bf16.msra.mxu0 0
    %875 = vmatprep.subr.bf16.mxu0 0
    %876 = vmatpush1.bf16.msra.mxu0 0
    %877 = vmatprep.subr.bf16.mxu0 0
    %878 = vmatpush1.bf16.msra.mxu0 0
    %879 = vmatprep.subr.bf16.mxu0 0
    %880 = vmatpush1.bf16.msra.mxu0 0
    %881 = vmatprep.subr.bf16.mxu0 0
    %882 = vmatpush1.bf16.msra.mxu0 0
    %883 = vmatprep.subr.bf16.mxu0 0
    %884 = vmatpush1.bf16.msra.mxu0 0
    %885 = vmatprep.mubr.bf16.mxu0 0
    %886 = vmatmul.mubr.bf16.gmra.mrb[0].mxu0 %v847
    %v887 = vpop.f32.mrb[0].mxu0
    %v888 = vadd.f32 %v843, %v887
    %v889 = vpop.f32.mrb[0].mxu0
    %v890 = vpop.f32.mrb[0].mxu0
    %v891 = vpop.f32.mrb[0].mxu0
    %892 = vdwg.mxu0
    %vm893 = vcmask 15360
    %894 = vst.msk [vmem:[%s12] sm:$0xff] %vm893, %v888
    // Predicated region
    $region58: #{mlp_classifier_forward.1} parent=1 // pred_check
      _
    $region59: #{mlp_classifier_forward.1} parent=1 // pred_check_branch
      %896 = sbr.rel (0) target = $region61
    $region60: #{mlp_classifier_forward.1} parent=1 // pred_region
      _
    $region61: #{mlp_classifier_forward.1} parent=1 // pred_fallthru
      _
    // Predicated region
    $region62: #{mlp_classifier_forward.1} parent=1 // pred_check
      _
    $region63: #{mlp_classifier_forward.1} parent=1 // pred_check_branch
      %898 = sbr.rel (0) target = $region65
    $region64: #{mlp_classifier_forward.1} parent=1 // pred_region
      _
    $region65: #{mlp_classifier_forward.1} parent=1 // pred_fallthru
      _
    %899 = vsyncpa [#allocation3], 1
    %900 = vsyncpa [#allocation5], 1

</llo_original>
